<compile_context>
chip_gen: v7x
topology: tpu7x:2x2x1
jax: 0.10.0
libtpu: 0.0.40
codegen_flags: <defaults>
</compile_context>

<pallas_src>
import jax
import jax.numpy as jnp
from jax import lax
from jax.experimental import pallas as pl
from jax.experimental.pallas import tpu as pltpu

_EPS = 1e-5
_LANE = 128
# Budget for the double-buffered (x in + y out) channel-tile working set.
_VMEM_TILE_BUDGET = 16 * 1024 * 1024
# Scoped-VMEM limit: above the v5e default (16 MiB), comfortably below
# physical VMEM on every generation (v7x: 64 MiB/TC).
_VMEM_LIMIT_BYTES = 32 * 1024 * 1024


def _cdbn_half_kernel(x_ref, g_ref, b_ref, o_ref):
    """Batch-norm one (half-batch, channel-tile) block with its own stats.

    x_ref: (half, TC) tile of one batch half (grid = (half index, channel tile)).
    g_ref, b_ref: (1, TC) gamma / beta slices (shared by both halves).
    o_ref: (half, TC) output tile.
    """
    x = x_ref[...].astype(jnp.float32)                          # (half, TC)
    # Per-channel batch statistics (biased variance, as in torch.batch_norm).
    mean = jnp.mean(x, axis=0, keepdims=True)                   # (1, TC)
    centered = x - mean
    var = jnp.mean(centered * centered, axis=0, keepdims=True)  # (1, TC)
    inv_std = lax.rsqrt(var + _EPS)                             # EUP slot
    gamma = g_ref[...].astype(jnp.float32)                      # (1, TC)
    beta = b_ref[...].astype(jnp.float32)                       # (1, TC)
    # Fold the affine: 2 VALU ops per element instead of 4.
    scale = inv_std * gamma                                     # (1, TC)
    shift = beta - mean * scale                                 # (1, TC)
    o_ref[...] = (x * scale + shift).astype(o_ref.dtype)


def _pick_channel_tile(half, c_pad, max_tile):
    """Largest multiple of 128 that divides c_pad, <= max_tile, within budget."""
    # f32 compute dominates the tile footprint: x in + y out, double buffered.
    bytes_per_channel = 2 * 2 * half * 4
    budget_tc = _VMEM_TILE_BUDGET // max(1, bytes_per_channel)
    tc = min(max_tile, c_pad, max(_LANE, (budget_tc // _LANE) * _LANE))
    tc = max(_LANE, (tc // _LANE) * _LANE)
    while c_pad % tc != 0:      # c_pad is a multiple of 128, so tc=128 always works
        tc -= _LANE
    return tc


def cdbn1d_forward(x, gamma, beta, *, max_channel_tile=512):
    """Training-mode forward of CDBN1d.

    x:     (B, C) with B even
    gamma: (C,)   BN_T.weight
    beta:  (C,)   BN_T.bias
    """
    B, C = x.shape
    assert B % 2 == 0, "batch size must be even"
    half = B // 2

    # Pad channels to a lane multiple so output stores are lane-dense.
    c_pad = ((C + _LANE - 1) // _LANE) * _LANE
    if c_pad != C:
        x_p = jnp.pad(x, ((0, 0), (0, c_pad - C)))
        g_p = jnp.pad(gamma, (0, c_pad - C))
        b_p = jnp.pad(beta, (0, c_pad - C))
    else:
        x_p, g_p, b_p = x, gamma, beta

    # (2, half, C): the half axis equals the full array dim -> valid block
    # shape for any even B (no sublane-multiple requirement).
    x3 = x_p.reshape(2, half, c_pad)
    g2 = g_p.reshape(1, c_pad)
    b2 = b_p.reshape(1, c_pad)

    tc = _pick_channel_tile(half, c_pad, max_channel_tile)
    n_ctiles = c_pad // tc

    x_spec = pl.BlockSpec((pl.Squeezed(), half, tc), lambda i, j: (i, 0, j))
    o_spec = pl.BlockSpec((pl.Squeezed(), half, tc), lambda i, j: (i, 0, j))

    out3 = pl.pallas_call(
        _cdbn_half_kernel,
        out_shape=jax.ShapeDtypeStruct((2, half, c_pad), x.dtype),
        grid_spec=pltpu.PrefetchScalarGridSpec(
            num_scalar_prefetch=0,
            grid=(2, n_ctiles),  # (batch half, channel tile)
            in_specs=[
                x_spec,                                          # x half block
                pl.BlockSpec((1, tc), lambda i, j: (0, j)),      # gamma slice
                pl.BlockSpec((1, tc), lambda i, j: (0, j)),      # beta slice
            ],
            out_specs=o_spec,
        ),
        compiler_params=pltpu.CompilerParams(
            dimension_semantics=("parallel", "parallel"),
            vmem_limit_bytes=_VMEM_LIMIT_BYTES,
        ),
    )(x3, g2, b2)

    out_p = out3.reshape(B, c_pad)
    if c_pad != C:
        out_p = out_p[:, :C]
    return out_p


def cdbn1d_reference(x, gamma, beta):
    """Pure-JAX reference mirroring the PyTorch training forward."""
    B, C = x.shape
    half = B // 2

    def bn(h):
        h32 = h.astype(jnp.float32)
        mean = jnp.mean(h32, axis=0, keepdims=True)
        var = jnp.mean((h32 - mean) ** 2, axis=0, keepdims=True)
        y = (h32 - mean) / jnp.sqrt(var + _EPS) * gamma + beta
        return y.astype(h.dtype)

    out1 = bn(x[:half])   # BN_S (borrows BN_T weight/bias)
    out2 = bn(x[half:])   # BN_T
    return jnp.concatenate([out1, out2], axis=0)


if __name__ == "__main__":
    key = jax.random.PRNGKey(0)
    keys = jax.random.split(key, 9)

    # Test 1: lane-dense channels, multiple channel tiles (grid = (2, 2)).
    B, C = 16, 256
    x = jax.random.normal(keys[0], (B, C), dtype=jnp.float32)
    gamma = 1.0 + 0.1 * jax.random.normal(keys[1], (C,), dtype=jnp.float32)
    beta = 0.1 * jax.random.normal(keys[2], (C,), dtype=jnp.float32)
    out = jax.block_until_ready(cdbn1d_forward(x, gamma, beta, max_channel_tile=128))
    ref = cdbn1d_reference(x, gamma, beta)
    assert out.shape == (B, C)
    assert jnp.allclose(out, ref, atol=2e-5, rtol=2e-5), "mismatch (dense C)"

    # Test 2: C not a multiple of 128 exercises the lane-padding path.
    B2, C2 = 16, 40
    x2 = jax.random.normal(keys[3], (B2, C2), dtype=jnp.float32)
    gamma2 = 1.0 + 0.1 * jax.random.normal(keys[4], (C2,), dtype=jnp.float32)
    beta2 = 0.1 * jax.random.normal(keys[5], (C2,), dtype=jnp.float32)
    out2 = jax.block_until_ready(cdbn1d_forward(x2, gamma2, beta2))
    ref2 = cdbn1d_reference(x2, gamma2, beta2)
    assert out2.shape == (B2, C2)
    assert jnp.allclose(out2, ref2, atol=2e-5, rtol=2e-5), "mismatch (padded C)"

    # Test 3: half-batch not a multiple of 8 sublanes (B=6 -> half=3).
    B3, C3 = 6, 128
    x3 = jax.random.normal(keys[6], (B3, C3), dtype=jnp.float32)
    gamma3 = 1.0 + 0.1 * jax.random.normal(keys[7], (C3,), dtype=jnp.float32)
    beta3 = 0.1 * jax.random.normal(keys[8], (C3,), dtype=jnp.float32)
    out3 = jax.block_until_ready(cdbn1d_forward(x3, gamma3, beta3))
    ref3 = cdbn1d_reference(x3, gamma3, beta3)
    assert out3.shape == (B3, C3)
    assert jnp.allclose(out3, ref3, atol=2e-5, rtol=2e-5), "mismatch (small half)"

    print("KERNEL_OK")
</pallas_src>

<mosaic_0001>
module attributes {stable_mosaic.version = 11 : i64} {
  func.func @_cdbn_half_kernel(%arg0: i32, %arg1: i32, %arg2: memref<1x8x128xf32, #tpu.memory_space<vmem>>, %arg3: memref<1x128xf32, #tpu.memory_space<vmem>>, %arg4: memref<1x128xf32, #tpu.memory_space<vmem>>, %arg5: memref<1x8x128xf32, #tpu.memory_space<vmem>>) attributes {dimension_semantics = [#tpu.dimension_semantics<parallel>, #tpu.dimension_semantics<parallel>], iteration_bounds = array<i64: 2, 2>, scalar_prefetch = 0 : i64, scratch_operands = 0 : i64, tpu.core_type = #tpu.core_type<tc>, window_params = [{transform_indices = @transform_0, window_bounds = array<i64: 1, 8, 128>}, {transform_indices = @transform_1, window_bounds = array<i64: 1, 128>}, {transform_indices = @transform_2, window_bounds = array<i64: 1, 128>}, {transform_indices = @transform_3, window_bounds = array<i64: 1, 8, 128>}]} {
    %c0 = arith.constant 0 : index
    %c0_0 = arith.constant 0 : index
    %c0_1 = arith.constant 0 : index
    %0 = vector.load %arg2[%c0, %c0_0, %c0_1] : memref<1x8x128xf32, #tpu.memory_space<vmem>>, vector<1x8x128xf32>
    %1 = vector.shape_cast %0 : vector<1x8x128xf32> to vector<8x128xf32>
    %cst = arith.constant dense<0.000000e+00> : vector<128xf32>
    %2 = vector.multi_reduction <add>, %1, %cst [0] : vector<8x128xf32> to vector<128xf32>
    %3 = vector.shape_cast %2 : vector<128xf32> to vector<1x128xf32>
    %cst_2 = arith.constant 8.000000e+00 : f32
    %4 = vector.broadcast %cst_2 : f32 to vector<1x128xf32>
    %5 = arith.divf %3, %4 : vector<1x128xf32>
    %6 = vector.broadcast %5 : vector<1x128xf32> to vector<8x128xf32>
    %7 = arith.subf %1, %6 : vector<8x128xf32>
    %8 = arith.mulf %7, %7 : vector<8x128xf32>
    %cst_3 = arith.constant dense<0.000000e+00> : vector<128xf32>
    %9 = vector.multi_reduction <add>, %8, %cst_3 [0] : vector<8x128xf32> to vector<128xf32>
    %10 = vector.shape_cast %9 : vector<128xf32> to vector<1x128xf32>
    %cst_4 = arith.constant 8.000000e+00 : f32
    %11 = vector.broadcast %cst_4 : f32 to vector<1x128xf32>
    %12 = arith.divf %10, %11 : vector<1x128xf32>
    %cst_5 = arith.constant 9.99999974E-6 : f32
    %13 = vector.broadcast %cst_5 : f32 to vector<1x128xf32>
    %14 = arith.addf %12, %13 : vector<1x128xf32>
    %15 = math.rsqrt %14 : vector<1x128xf32>
    %c0_6 = arith.constant 0 : index
    %c0_7 = arith.constant 0 : index
    %16 = vector.load %arg3[%c0_6, %c0_7] : memref<1x128xf32, #tpu.memory_space<vmem>>, vector<1x128xf32>
    %c0_8 = arith.constant 0 : index
    %c0_9 = arith.constant 0 : index
    %17 = vector.load %arg4[%c0_8, %c0_9] : memref<1x128xf32, #tpu.memory_space<vmem>>, vector<1x128xf32>
    %18 = arith.mulf %15, %16 : vector<1x128xf32>
    %19 = arith.mulf %5, %18 : vector<1x128xf32>
    %20 = arith.subf %17, %19 : vector<1x128xf32>
    %21 = vector.broadcast %18 : vector<1x128xf32> to vector<8x128xf32>
    %22 = arith.mulf %1, %21 : vector<8x128xf32>
    %23 = vector.broadcast %20 : vector<1x128xf32> to vector<8x128xf32>
    %24 = arith.addf %22, %23 : vector<8x128xf32>
    %c0_10 = arith.constant 0 : index
    %c0_11 = arith.constant 0 : index
    %c0_12 = arith.constant 0 : index
    %25 = vector.load %arg5[%c0_10, %c0_11, %c0_12] : memref<1x8x128xf32, #tpu.memory_space<vmem>>, vector<1x8x128xf32>
    %26 = vector.shape_cast %25 : vector<1x8x128xf32> to vector<8x128xf32>
    %27 = vector.shape_cast %24 : vector<8x128xf32> to vector<1x8x128xf32>
    tpu.vector_store %arg5[%c0_10, %c0_11, %c0_12], %27 {strides = array<i32>} : memref<1x8x128xf32, #tpu.memory_space<vmem>>, vector<1x8x128xf32>,
    return
  }
  func.func @transform_0(%arg0: i32, %arg1: i32) -> (i32, i32, i32) {
    %c0_i32 = arith.constant 0 : i32
    %c0_i32_0 = arith.constant 0 : i32
    return %arg0, %c0_i32, %arg1 : i32, i32, i32
  }
  func.func @transform_1(%arg0: i32, %arg1: i32) -> (i32, i32) {
    %c0_i32 = arith.constant 0 : i32
    %c0_i32_0 = arith.constant 0 : i32
    return %c0_i32, %arg1 : i32, i32
  }
  func.func @transform_2(%arg0: i32, %arg1: i32) -> (i32, i32) {
    %c0_i32 = arith.constant 0 : i32
    %c0_i32_0 = arith.constant 0 : i32
    return %c0_i32, %arg1 : i32, i32
  }
  func.func @transform_3(%arg0: i32, %arg1: i32) -> (i32, i32, i32) {
    %c0_i32 = arith.constant 0 : i32
    %c0_i32_0 = arith.constant 0 : i32
    return %arg0, %c0_i32, %arg1 : i32, i32, i32
  }
}

</mosaic_0001>

<llo_original>
// kernel: tpu_custom_call.1
$region0: #{tpu_custom_call.1}
  #allocation0 [shape = 'u32[]', space=smem, size = 0x4, offset = 0x4, fixed_abs, tag = 'smem constant byte address 0x4 - core index']
  #allocation1 [shape = 'u32[144,128]{1,0:T(1,128)}', space=vmem, size = 0x12000, scoped, tag = 'internal scratch']
  %s0 = inlined_call_operand.hbm [shape: f32[2,8,256], index: 0, kind: input, shape index: {}]
  %s1 = inlined_call_operand.vmem [shape: f32[1,256], index: 1, kind: input, shape index: {}]
  %s2 = inlined_call_operand.vmem [shape: f32[1,256], index: 2, kind: input, shape index: {}]
  %s3 = inlined_call_operand.hbm [shape: f32[2,8,256], index: 3, kind: output, shape index: {}]
  %s4 = sld [smem:[#allocation0]]
  $region49: #{tpu_custom_call.1} parent=0
    _
  %s6 = ssub.s32 1, %s4
  %s7 = scalar_select 0, %s6, %s4
  $region1: #{tpu_custom_call.1} parent=0
    #allocation2 [shape = 'u8[8192]{0}', space=vmem, size = 0x2000, scoped, tag = 'input window, operand 0']
    #allocation3 [shape = 's32[2]{0}', space=sflag, size = 0x8, scoped, tag = 'scoped memory for tpu_custom_call.1']
    #allocation4 [shape = 's32[2]{0}', space=sflag, size = 0x8, scoped, tag = 'scoped memory for tpu_custom_call.1']
    #allocation5 [shape = 'u8[8192]{0}', space=vmem, size = 0x2000, scoped, tag = 'output window, operand 0']
    %8 = vsyncpa [#allocation3], 0
    %s9 = scalar_lea.sflag [#allocation3], 1
    %10 = vsyncpa %s9, 0
    %11 = vsyncpa [#allocation4], 0
    %s12 = scalar_lea.sflag [#allocation4], 1
    %13 = vsyncpa %s12, 0
    loop: start=0, step=1, limit=6
    $region2: #{tpu_custom_call.1} parent=1 // loop_pre_header
      _
    $region3: #{tpu_custom_call.1} parent=1 // loop_header
      %s15 = sphi 0, %s19
      %p16 = scmp.ge.s32.totalorder %s15, 6
      %s22 = sphi 0, %s34
      %s23 = sphi 0, %s30
      %s24 = sphi 0, %s22
      %s25 = sphi 0, %s23
      %s26 = sphi 0, %s24
      %s27 = sphi 0, %s25
      %s39 = sphi 0, %s41
      %s42 = sphi 0, %s39
      %s43 = sphi 0, %s42
      %s59 = sphi 0, %s43
      %s65 = sphi 0, %s67
      %s68 = sphi 0, %s65
      %s69 = sphi 0, %s68
      %s85 = sphi 0, %s69
      %s91 = sphi 0, %s93
      %s94 = sphi 0, %s91
      %s95 = sphi 0, %s94
      %s111 = sphi 0, %s95
      %s119 = sphi 0, %s121
      %s122 = sphi 0, %s119
      %s123 = sphi 0, %s122
      %s139 = sphi 0, %s123
    $region4: #{tpu_custom_call.1} parent=1 // loop_header_branch
      %18 = sbr.rel (%p16) target = $region8
    $region5: #{tpu_custom_call.1} parent=1 // loop_body
      %s20 = ssub.s32 %s15, 1
      %s21 = ssub.s32 %s15, 2
      %s28 = sadd.s32 1, %s23
      %p29 = scmp.ge.s32.totalorder %s28, 2
      %s30 = scalar_select %p29, 0, %s28
      %s31 = sadd.s32 1, %s22
      %s32 = scalar_select %p29, %s31, %s22
      %p33 = scmp.ge.s32.totalorder %s32, 2
      %s34 = scalar_select %p33, 0, %s32
      %s35 = ssub.s32 %s22, %s34
      %s36 = ssub.s32 %s23, %s30
      %s37 = sor.u32 %s35, %s36
      %p38 = scmp.eq.s32.totalorder %s37, 0
      %s40 = sadd.s32 %s39, 1
      %s41 = scalar_select %p38, %s39, %s40
      %p44 = pneg %p38
      %p45 = scmp.eq.s32.totalorder %s15, 3
      %p46 = por %p44, %p45
      %p47 = scmp.ne.s32.totalorder %s39, %s42
      %p48 = scmp.eq.s32.totalorder %s15, 0
      %p49 = por %p47, %p48
      %p50 = scmp.ne.s32.totalorder %s39, %s42
      %p51 = scmp.eq.s32.totalorder %s20, 3
      %p52 = por %p50, %p51
      %p53 = scmp.ne.s32.totalorder %s42, %s43
      %p54 = scmp.eq.s32.totalorder %s20, 0
      %p55 = por %p53, %p54
      %p56 = scmp.ne.s32.totalorder %s42, %s43
      %p57 = scmp.eq.s32.totalorder %s21, 3
      %p58 = por %p56, %p57
      %p60 = scmp.ne.s32.totalorder %s43, %s59
      %p61 = scmp.eq.s32.totalorder %s21, 0
      %p62 = por %p60, %p61
      %s63 = ssub.s32 %s23, %s30
      %p64 = scmp.eq.s32.totalorder %s63, 0
      %s66 = sadd.s32 %s65, 1
      %s67 = scalar_select %p64, %s65, %s66
      %p70 = pneg %p64
      %p71 = scmp.eq.s32.totalorder %s15, 3
      %p72 = por %p70, %p71
      %p73 = scmp.ne.s32.totalorder %s65, %s68
      %p74 = scmp.eq.s32.totalorder %s15, 0
      %p75 = por %p73, %p74
      %p76 = scmp.ne.s32.totalorder %s65, %s68
      %p77 = scmp.eq.s32.totalorder %s20, 3
      %p78 = por %p76, %p77
      %p79 = scmp.ne.s32.totalorder %s68, %s69
      %p80 = scmp.eq.s32.totalorder %s20, 0
      %p81 = por %p79, %p80
      %p82 = scmp.ne.s32.totalorder %s68, %s69
      %p83 = scmp.eq.s32.totalorder %s21, 3
      %p84 = por %p82, %p83
      %p86 = scmp.ne.s32.totalorder %s69, %s85
      %p87 = scmp.eq.s32.totalorder %s21, 0
      %p88 = por %p86, %p87
      %s89 = ssub.s32 %s23, %s30
      %p90 = scmp.eq.s32.totalorder %s89, 0
      %s92 = sadd.s32 %s91, 1
      %s93 = scalar_select %p90, %s91, %s92
      %p96 = pneg %p90
      %p97 = scmp.eq.s32.totalorder %s15, 3
      %p98 = por %p96, %p97
      %p99 = scmp.ne.s32.totalorder %s91, %s94
      %p100 = scmp.eq.s32.totalorder %s15, 0
      %p101 = por %p99, %p100
      %p102 = scmp.ne.s32.totalorder %s91, %s94
      %p103 = scmp.eq.s32.totalorder %s20, 3
      %p104 = por %p102, %p103
      %p105 = scmp.ne.s32.totalorder %s94, %s95
      %p106 = scmp.eq.s32.totalorder %s20, 0
      %p107 = por %p105, %p106
      %p108 = scmp.ne.s32.totalorder %s94, %s95
      %p109 = scmp.eq.s32.totalorder %s21, 3
      %p110 = por %p108, %p109
      %p112 = scmp.ne.s32.totalorder %s95, %s111
      %p113 = scmp.eq.s32.totalorder %s21, 0
      %p114 = por %p112, %p113
      %s115 = ssub.s32 %s22, %s34
      %s116 = ssub.s32 %s23, %s30
      %s117 = sor.u32 %s115, %s116
      %p118 = scmp.eq.s32.totalorder %s117, 0
      %s120 = sadd.s32 %s119, 1
      %s121 = scalar_select %p118, %s119, %s120
      %p124 = pneg %p118
      %p125 = scmp.eq.s32.totalorder %s15, 3
      %p126 = por %p124, %p125
      %p127 = scmp.ne.s32.totalorder %s119, %s122
      %p128 = scmp.eq.s32.totalorder %s15, 0
      %p129 = por %p127, %p128
      %p130 = scmp.ne.s32.totalorder %s119, %s122
      %p131 = scmp.eq.s32.totalorder %s20, 3
      %p132 = por %p130, %p131
      %p133 = scmp.ne.s32.totalorder %s122, %s123
      %p134 = scmp.eq.s32.totalorder %s20, 0
      %p135 = por %p133, %p134
      %p136 = scmp.ne.s32.totalorder %s122, %s123
      %p137 = scmp.eq.s32.totalorder %s21, 3
      %p138 = por %p136, %p137
      %p140 = scmp.ne.s32.totalorder %s123, %s139
      %p141 = scmp.eq.s32.totalorder %s21, 0
      %p142 = por %p140, %p141
      %p143 = scmp.le.s32.totalorder 1, %s15
      %p144 = scmp.lt.s32.totalorder %s15, 5
      %p145 = pnand %p143, %p144
      %p146 = pneg %p145
      // Predicated region
      $region9: #{tpu_custom_call.1} parent=5 // pred_check
        _
      $region10: #{tpu_custom_call.1} parent=5 // pred_check_branch
        %148 = sbr.rel (%p145) target = $region12
      $region11: #{tpu_custom_call.1} parent=5 // pred_region
        %s149 = ssub.s32 %s15, 1
      $region12: #{tpu_custom_call.1} parent=5 // pred_fallthru
        _
      %p150 = scmp.lt.s32.totalorder %s15, 4
      // Predicated region
      $region13: #{tpu_custom_call.1} parent=5 // pred_check
        %p151 = pneg %p150
      $region14: #{tpu_custom_call.1} parent=5 // pred_check_branch
        %153 = sbr.rel (%p151) target = $region16
      $region15: #{tpu_custom_call.1} parent=5 // pred_region
        // Predicated region
        $region17: #{tpu_custom_call.1} parent=15 // pred_check
          %p154 = pneg %p49
        $region18: #{tpu_custom_call.1} parent=15 // pred_check_branch
          %156 = sbr.rel (%p154) target = $region20
        $region19: #{tpu_custom_call.1} parent=15 // pred_region
          %s157 = sand.u32 %s39, 1
          %s158 = scalar_lea.sflag [#allocation3], %s157
          %s159 = sand.u32 %s39, 1
          %s160 = smul.addr %s159, 8
          %s161 = scalar_lea.vmem [#allocation2], %s160
          %s163 = ssub.s32 128, 128
          %164 = vsyncadd %s158, %s163
          %s165 = smul.addr %s22, 2
          %s166 = sadd.s32 %s23, %s165
          %s167 = smul.addr %s166, 128
          %s168 = scalar_lea.hbm %s0, %s167
          %s170 = sshll.u32 %s161, 4
          %s171 = int_to_ptr.vmem [resolvable:$true] %s170
          %173 = dma.hbm_to_vmem [thread:$0]  %s168, 128, %s171, %s158
        $region20: #{tpu_custom_call.1} parent=15 // pred_fallthru
          _
        // Predicated region
        $region21: #{tpu_custom_call.1} parent=15 // pred_check
          %p174 = pneg %p75
        $region22: #{tpu_custom_call.1} parent=15 // pred_check_branch
          %176 = sbr.rel (%p174) target = $region24
        $region23: #{tpu_custom_call.1} parent=15 // pred_region
          %p177 = scmp.lt.s32.totalorder %s23, 1
          %s178 = scalar_select %p177, %s23, 1
          %s179 = scalar_lea.vmem %s1, %s178
        $region24: #{tpu_custom_call.1} parent=15 // pred_fallthru
          _
        // Predicated region
        $region25: #{tpu_custom_call.1} parent=15 // pred_check
          %p180 = pneg %p101
        $region26: #{tpu_custom_call.1} parent=15 // pred_check_branch
          %182 = sbr.rel (%p180) target = $region28
        $region27: #{tpu_custom_call.1} parent=15 // pred_region
          %p183 = scmp.lt.s32.totalorder %s23, 1
          %s184 = scalar_select %p183, %s23, 1
          %s185 = scalar_lea.vmem %s2, %s184
        $region28: #{tpu_custom_call.1} parent=15 // pred_fallthru
          _
      $region16: #{tpu_custom_call.1} parent=5 // pred_fallthru
        _
      %p186 = scmp.le.s32.totalorder 1, %s15
      %p187 = scmp.lt.s32.totalorder %s15, 5
      %p188 = pnand %p186, %p187
      %p189 = pneg %p188
      // Predicated region
      $region29: #{tpu_custom_call.1} parent=5 // pred_check
        _
      $region30: #{tpu_custom_call.1} parent=5 // pred_check_branch
        %191 = sbr.rel (%p188) target = $region32
      $region31: #{tpu_custom_call.1} parent=5 // pred_region
        %s192 = ssub.s32 %s15, 1
        %s193 = sand.u32 %s42, 1
        %s194 = scalar_lea.sflag [#allocation3], %s193
        %s195 = sand.u32 %s42, 1
        %s196 = smul.addr %s195, 8
        %s197 = scalar_lea.vmem [#allocation2], %s196
        // Predicated region
        $region33: #{tpu_custom_call.1} parent=31 // pred_check
          %p198 = pneg %p55
        $region34: #{tpu_custom_call.1} parent=31 // pred_check_branch
          %200 = sbr.rel (%p198) target = $region36
        $region35: #{tpu_custom_call.1} parent=31 // pred_region
          %201 = dma.done %s194, 128
        $region36: #{tpu_custom_call.1} parent=31 // pred_fallthru
          _
        %s202 = sand.u32 %s42, 1
        %s203 = scalar_lea.sflag [#allocation3], %s202
        %s204 = sand.u32 %s42, 1
        %s205 = smul.addr %s204, 8
        %s206 = scalar_lea.vmem [#allocation2], %s205
        %p207 = pneg %p55
        %p208 = pneg %p52
        %p209 = scmp.lt.s32.totalorder %s25, 1
        %s210 = scalar_select %p209, %s25, 1
        %s211 = scalar_lea.vmem %s1, %s210
        %p212 = pneg %p81
        %p213 = pneg %p78
        %p214 = scmp.lt.s32.totalorder %s25, 1
        %s215 = scalar_select %p214, %s25, 1
        %s216 = scalar_lea.vmem %s2, %s215
        %p217 = pneg %p107
        %p218 = pneg %p104
        %p219 = pneg %p135
        %p220 = pneg %p132
        %s221 = sand.u32 %s122, 1
        %s222 = scalar_lea.sflag [#allocation4], %s221
        %s223 = sand.u32 %s122, 1
        %s224 = smul.addr %s223, 8
        %s225 = scalar_lea.vmem [#allocation5], %s224
        %p226 = scmp.lt.s32.totalorder %s25, 1
        %s227 = scalar_select %p226, %s25, 1
        %s228 = scalar_lea.vmem %s1, %s227
        %p229 = scmp.lt.s32.totalorder %s25, 1
        %s230 = scalar_select %p229, %s25, 1
        %s231 = scalar_lea.vmem %s2, %s230
        %v232 = vld [vmem:[%s197] sm:$0xff]
        %v233 = vrot.slane %v232, 4
        %v234 = vadd.f32 %v232, %v233
        %v235 = vrot.slane %v234, 2
        %v236 = vadd.f32 %v234, %v235
        %v237 = vrot.slane %v236, 1
        %v238 = vadd.f32 %v236, %v237
        %v239 = vrcp.pop 8.0
        %v240 = vmul.f32 %v238, %v239
        %v241 = vsub.f32 %v232, %v240
        %v242 = vmul.f32 %v241, %v241
        %v243 = vrot.slane %v242, 4
        %v244 = vadd.f32 %v242, %v243
        %v245 = vrot.slane %v244, 2
        %v246 = vadd.f32 %v244, %v245
        %v247 = vrot.slane %v246, 1
        %v248 = vadd.f32 %v246, %v247
        %v249 = vmul.f32 %v248, %v239
        %v250 = vadd.f32 %v249, 1e-05
        %v251 = vrsqrt.pop %v250
        %v252 = vld [vmem:[%s228] sm:$0x1]
        %v253 = vld [vmem:[%s231] sm:$0x1]
        %v254 = vmul.f32 %v251, %v252
        %v255 = vmul.f32 %v240, %v254
        %v256 = vsub.f32 %v253, %v255
        %v257 = vlaneseq
        %v258 = vshrl.u32 %v257, 7
        %v259 = vsub.s32 0, %v258
        %v260 = vrot.slane %v254, %v259
        %v261 = vmul.f32 %v232, %v260
        %v263 = vlaneseq
        %v264 = vshrl.u32 %v263, 7
        %v265 = vsub.s32 0, %v264
        %v266 = vrot.slane %v256, %v265
        %v268 = vadd.f32 %v261, %v266
        %269 = vst [vmem:[%s225] sm:$0xff] %v268
        %s270 = sand.u32 %s122, 1
        %s271 = scalar_lea.sflag [#allocation4], %s270
        %s272 = sand.u32 %s122, 1
        %s273 = smul.addr %s272, 8
        %s274 = scalar_lea.vmem [#allocation5], %s273
        // Predicated region
        $region37: #{tpu_custom_call.1} parent=31 // pred_check
          %p275 = pneg %p132
        $region38: #{tpu_custom_call.1} parent=31 // pred_check_branch
          %277 = sbr.rel (%p275) target = $region40
        $region39: #{tpu_custom_call.1} parent=31 // pred_region
          %s279 = ssub.s32 128, 128
          %280 = vsyncadd %s271, %s279
          %s281 = smul.addr %s24, 2
          %s282 = sadd.s32 %s25, %s281
          %s283 = smul.addr %s282, 128
          %s284 = scalar_lea.hbm %s3, %s283
          %s286 = sshll.u32 %s274, 4
          %s287 = int_to_ptr.vmem [resolvable:$true] %s286
          %289 = dma.vmem_to_hbm [thread:$0]  %s287, 128, %s284, %s271
        $region40: #{tpu_custom_call.1} parent=31 // pred_fallthru
          _
      $region32: #{tpu_custom_call.1} parent=5 // pred_fallthru
        _
      %p290 = scmp.le.s32.totalorder 2, %s15
      // Predicated region
      $region41: #{tpu_custom_call.1} parent=5 // pred_check
        %p291 = pneg %p290
      $region42: #{tpu_custom_call.1} parent=5 // pred_check_branch
        %293 = sbr.rel (%p291) target = $region44
      $region43: #{tpu_custom_call.1} parent=5 // pred_region
        %s294 = ssub.s32 %s15, 2
        // Predicated region
        $region45: #{tpu_custom_call.1} parent=43 // pred_check
          %p295 = pneg %p138
        $region46: #{tpu_custom_call.1} parent=43 // pred_check_branch
          %297 = sbr.rel (%p295) target = $region48
        $region47: #{tpu_custom_call.1} parent=43 // pred_region
          %s298 = sand.u32 %s123, 1
          %s299 = scalar_lea.sflag [#allocation4], %s298
          %s300 = sand.u32 %s123, 1
          %s301 = smul.addr %s300, 8
          %s302 = scalar_lea.vmem [#allocation5], %s301
          %303 = dma.done %s299, 128
        $region48: #{tpu_custom_call.1} parent=43 // pred_fallthru
          _
      $region44: #{tpu_custom_call.1} parent=5 // pred_fallthru
        _
    $region6: #{tpu_custom_call.1} parent=1 // loop_footer
      %s19 = sadd.s32 1, %s15
    $region7: #{tpu_custom_call.1} parent=1 // loop_footer_branch
      %14 = sbr.rel target = $region3
    $region8: #{tpu_custom_call.1} parent=1 // loop_exit
      _
    %304 = vsyncpa [#allocation3], 1
    %s305 = scalar_lea.sflag [#allocation3], 1
    %306 = vsyncpa %s305, 1
    %307 = vsyncpa [#allocation4], 1
    %s308 = scalar_lea.sflag [#allocation4], 1
    %309 = vsyncpa %s308, 1

</llo_original>
